<compile_context>
chip_gen: v7x
topology: tpu7x:2x2x1
jax: 0.10.0
libtpu: 0.0.40
codegen_flags: <defaults>
</compile_context>

<pallas_src>
import jax
import jax.numpy as jnp
from jax.experimental import pallas as pl
from jax.experimental.pallas import tpu as pltpu


def _round_up(x, m):
    return ((x + m - 1) // m) * m


def _cdiv(a, b):
    return (a + b - 1) // b


def _vmem_capacity_bytes():
    """Physical VMEM per TensorCore, with conservative fallbacks."""
    try:
        return int(pltpu.get_tpu_info().vmem_capacity_bytes)
    except Exception:
        pass
    try:
        kind = jax.devices()[0].device_kind.lower()
        if "v7" in kind:
            return 64 * 1024 * 1024
        return 128 * 1024 * 1024          # v4 / v5e / v5p / v6e
    except Exception:
        return 64 * 1024 * 1024           # safest assumption (v7x)


def _plan_tiles(rows, D, d_ff, x_bytes, w_bytes, out_bytes, vmem_budget):
    """Return (tile_m, tile_f, weights_resident)."""
    row_align = 16 if x_bytes == 2 else 8
    # Keep >= 2 row tiles when possible so v7x's second TensorCore gets work.
    rows_cap = max(row_align, _round_up(_cdiv(rows, 2), row_align))

    def clamp_m(tm):
        return max(row_align, min(_round_up(tm, row_align), rows_cap))

    def vmem_need(tile_m, tile_f):
        weights = 2 * 2 * D * tile_f * w_bytes           # W1+W2 blocks, 2-deep
        act = 2 * tile_m * D * (x_bytes + out_bytes)     # x/out blocks, 2-deep
        acc = tile_m * D * 4                             # f32 accumulator
        h = tile_m * tile_f * (4 + w_bytes)              # f32 h + cast for dot2
        return weights + act + acc + h

    # 1) weight residency (tile_f = d_ff): weights fetched from HBM exactly once
    for tm in (512, 256, 128, 64, 32, 16, 8):
        tile_m = clamp_m(tm)
        if vmem_need(tile_m, d_ff) <= vmem_budget:
            return tile_m, d_ff, True

    # 2) streamed weights: 256-aligned d_ff chunks, tile_m as large as fits so
    #    per-step intensity (~tile_m FLOP/weight-byte) crosses the roofline
    tile_f = min(512, _round_up(d_ff, 256))
    for tm in (1024, 768, 512, 384, 256, 128, 64, 32, 16, 8):
        tile_m = clamp_m(tm)
        if vmem_need(tile_m, tile_f) <= vmem_budget:
            return tile_m, tile_f, False

    # 3) last resort: smallest legal tiles
    return row_align, min(_round_up(d_ff, 128), 256), False


def _ffn_ln_kernel(x_ref, w1_ref, w2_ref, o_ref, acc_ref):
    # x_ref: (tile_m, D)  w1_ref: (D, tile_f)  w2_ref: (tile_f, D)
    # acc_ref: (tile_m, D) f32 accumulator, resident across the d_ff axis.
    k = pl.program_id(1)

    @pl.when(k == 0)
    def _():
        acc_ref[...] = jnp.zeros_like(acc_ref)

    # FFN hot path on the MXU: operands in the weight dtype (bf16xbf16 fast
    # path when weights are bf16), accumulation in f32.
    x_in = x_ref[...].astype(w1_ref.dtype)
    h = jnp.dot(x_in, w1_ref[...], preferred_element_type=jnp.float32)
    h = jnp.maximum(h, 0.0)                                     # ReLU
    acc_ref[...] += jnp.dot(h.astype(w2_ref.dtype), w2_ref[...],
                            preferred_element_type=jnp.float32)

    # Last d_ff chunk: residual add + LayerNorm (f32 math), then store.
    @pl.when(k == pl.num_programs(1) - 1)
    def _():
        y = acc_ref[...] + x_ref[...].astype(jnp.float32)
        mean = jnp.mean(y, axis=-1, keepdims=True)
        centered = y - mean
        var = jnp.mean(centered * centered, axis=-1, keepdims=True)
        o_ref[...] = (centered * jax.lax.rsqrt(var + 1e-5)).astype(o_ref.dtype)


def poswise_ffn(x, w1, w2):
    """x: [B, S, d_model], w1: [d_model, d_ff], w2: [d_ff, d_model]."""
    B, S, D = x.shape
    d_ff = w1.shape[1]
    assert w1.shape == (D, d_ff) and w2.shape == (d_ff, D)

    rows = B * S
    x2d = x.reshape(rows, D)

    # ---- per-generation VMEM budget -------------------------------------
    capacity = _vmem_capacity_bytes()
    vmem_limit = int(0.8 * capacity)       # headroom vs. physical VMEM
    vmem_budget = int(0.9 * vmem_limit)    # headroom for compiler scratch

    x_bytes = x.dtype.itemsize
    w_bytes = w1.dtype.itemsize
    tile_m, tile_f, resident = _plan_tiles(
        rows, D, d_ff, x_bytes, w_bytes, x_bytes, vmem_budget)

    # ---- row tiling: pad ragged B*S, slice at the end --------------------
    rows_p = _round_up(rows, tile_m)
    if rows_p != rows:
        x2d = jnp.pad(x2d, ((0, rows_p - rows), (0, 0)))

    # ---- d_ff tiling (reduction axis) ------------------------------------
    if resident:
        dff_p = d_ff
        w1p, w2p = w1, w2
    else:
        dff_p = _round_up(d_ff, tile_f)
        if dff_p != d_ff:  # zero-padded d_ff chunks contribute exactly 0
            w1p = jnp.pad(w1, ((0, 0), (0, dff_p - d_ff)))
            w2p = jnp.pad(w2, ((0, dff_p - d_ff), (0, 0)))
        else:
            w1p, w2p = w1, w2

    grid = (rows_p // tile_m, dff_p // tile_f)

    weight_bytes = (w1p.size * w1p.dtype.itemsize
                    + w2p.size * w2p.dtype.itemsize)
    weight_passes = 1 if resident else grid[0]
    cost = pl.CostEstimate(
        flops=4 * rows_p * D * dff_p,
        transcendentals=0,
        bytes_accessed=(2 * rows_p * D * x_bytes
                        + weight_passes * weight_bytes),
    )

    out2d = pl.pallas_call(
        _ffn_ln_kernel,
        out_shape=jax.ShapeDtypeStruct((rows_p, D), x.dtype),
        grid_spec=pltpu.PrefetchScalarGridSpec(
            num_scalar_prefetch=0,
            grid=grid,
            in_specs=[
                pl.BlockSpec((tile_m, D), lambda i, k: (i, 0)),     # x rows
                pl.BlockSpec((D, tile_f), lambda i, k: (0, k)),     # W1 cols
                pl.BlockSpec((tile_f, D), lambda i, k: (k, 0)),     # W2 rows
            ],
            out_specs=pl.BlockSpec((tile_m, D), lambda i, k: (i, 0)),
            scratch_shapes=[pltpu.VMEM((tile_m, D), jnp.float32)],
        ),
        compiler_params=pltpu.CompilerParams(
            dimension_semantics=("parallel", "arbitrary"),
            vmem_limit_bytes=vmem_limit,
        ),
        cost_estimate=cost,
    )(x2d, w1p, w2p)

    if rows_p != rows:
        out2d = out2d[:rows]
    return out2d.reshape(B, S, D)


if __name__ == "__main__":
    # config-equivalent small shapes
    batch, seq, d_model, d_ff = 2, 8, 32, 64

    key = jax.random.PRNGKey(0)
    kx, k1, k2 = jax.random.split(key, 3)

    x = jax.random.normal(kx, (batch, seq, d_model), dtype=jnp.float32)
    # deterministic "nn.Linear"-style weights (no bias), stored as [in, out]
    w1 = jax.random.uniform(k1, (d_model, d_ff), dtype=jnp.float32,
                            minval=-1.0, maxval=1.0) / jnp.sqrt(d_model)
    w2 = jax.random.uniform(k2, (d_ff, d_model), dtype=jnp.float32,
                            minval=-1.0, maxval=1.0) / jnp.sqrt(d_ff)

    out = poswise_ffn(x, w1, w2)
    jax.block_until_ready(out)

    # sanity check against pure-JAX reference
    h_ref = jnp.maximum(x @ w1, 0.0) @ w2 + x
    mu = h_ref.mean(-1, keepdims=True)
    var = ((h_ref - mu) ** 2).mean(-1, keepdims=True)
    ref = (h_ref - mu) / jnp.sqrt(var + 1e-5)
    assert jnp.allclose(out, ref, atol=1e-4, rtol=1e-4)

    print("KERNEL_OK")
</pallas_src>

<mosaic_0001>
module attributes {stable_mosaic.version = 11 : i64} {
  func.func @_ffn_ln_kernel(%arg0: i32, %arg1: i32, %arg2: memref<8x32xf32, #tpu.memory_space<vmem>>, %arg3: memref<32x64xf32, #tpu.memory_space<vmem>>, %arg4: memref<64x32xf32, #tpu.memory_space<vmem>>, %arg5: memref<8x32xf32, #tpu.memory_space<vmem>>, %arg6: memref<8x32xf32, #tpu.memory_space<vmem>>) attributes {dimension_semantics = [#tpu.dimension_semantics<parallel>, #tpu.dimension_semantics<arbitrary>], iteration_bounds = array<i64: 2, 1>, scalar_prefetch = 0 : i64, scratch_operands = 1 : i64, tpu.core_type = #tpu.core_type<tc>, window_params = [{transform_indices = @transform_0, window_bounds = array<i64: 8, 32>}, {transform_indices = @transform_1, window_bounds = array<i64: 32, 64>}, {transform_indices = @transform_2, window_bounds = array<i64: 64, 32>}, {transform_indices = @transform_3, window_bounds = array<i64: 8, 32>}]} {
    %c0_i32 = arith.constant 0 : i32
    %0 = arith.cmpi eq, %arg1, %c0_i32 : i32
    %1 = arith.extui %0 : i1 to i32
    %c0_i32_0 = arith.constant 0 : i32
    %2 = arith.cmpi ne, %1, %c0_i32_0 : i32
    scf.if %2 {
      %cst_14 = arith.constant 0.000000e+00 : f32
      %16 = vector.broadcast %cst_14 : f32 to vector<8x32xf32>
      %c0_15 = arith.constant 0 : index
      %c0_16 = arith.constant 0 : index
      %17 = vector.load %arg6[%c0_15, %c0_16] : memref<8x32xf32, #tpu.memory_space<vmem>>, vector<8x32xf32>
      tpu.vector_store %arg6[%c0_15, %c0_16], %16 {strides = array<i32>} : memref<8x32xf32, #tpu.memory_space<vmem>>, vector<8x32xf32>,
    } else {
    }
    %c0 = arith.constant 0 : index
    %c0_1 = arith.constant 0 : index
    %3 = vector.load %arg2[%c0, %c0_1] : memref<8x32xf32, #tpu.memory_space<vmem>>, vector<8x32xf32>
    %c0_2 = arith.constant 0 : index
    %c0_3 = arith.constant 0 : index
    %4 = vector.load %arg3[%c0_2, %c0_3] : memref<32x64xf32, #tpu.memory_space<vmem>>, vector<32x64xf32>
    %cst = arith.constant dense<0.000000e+00> : vector<8x64xf32>
    %5 = tpu.matmul %3, %4, %cst {dimension_numbers = #tpu.dot_dimension_numbers<[1], [0], [0], [1], [0, 0, 1, 1], [], []>} : vector<8x32xf32>, vector<32x64xf32>, vector<8x64xf32> -> vector<8x64xf32>
    %cst_4 = arith.constant 0.000000e+00 : f32
    %6 = vector.broadcast %cst_4 : f32 to vector<8x64xf32>
    %7 = arith.maximumf %5, %6 : vector<8x64xf32>
    %c0_5 = arith.constant 0 : index
    %c0_6 = arith.constant 0 : index
    %8 = vector.load %arg6[%c0_5, %c0_6] : memref<8x32xf32, #tpu.memory_space<vmem>>, vector<8x32xf32>
    %c0_7 = arith.constant 0 : index
    %c0_8 = arith.constant 0 : index
    %9 = vector.load %arg4[%c0_7, %c0_8] : memref<64x32xf32, #tpu.memory_space<vmem>>, vector<64x32xf32>
    %cst_9 = arith.constant dense<0.000000e+00> : vector<8x32xf32>
    %10 = tpu.matmul %7, %9, %cst_9 {dimension_numbers = #tpu.dot_dimension_numbers<[1], [0], [0], [1], [0, 0, 1, 1], [], []>} : vector<8x64xf32>, vector<64x32xf32>, vector<8x32xf32> -> vector<8x32xf32>
    %11 = arith.addf %8, %10 : vector<8x32xf32>
    %c0_10 = arith.constant 0 : index
    %c0_11 = arith.constant 0 : index
    %12 = vector.load %arg6[%c0_10, %c0_11] : memref<8x32xf32, #tpu.memory_space<vmem>>, vector<8x32xf32>
    tpu.vector_store %arg6[%c0_10, %c0_11], %11 {strides = array<i32>} : memref<8x32xf32, #tpu.memory_space<vmem>>, vector<8x32xf32>,
    %c0_i32_12 = arith.constant 0 : i32
    %13 = arith.cmpi eq, %arg1, %c0_i32_12 : i32
    %14 = arith.extui %13 : i1 to i32
    %c0_i32_13 = arith.constant 0 : i32
    %15 = arith.cmpi ne, %14, %c0_i32_13 : i32
    scf.if %15 {
      %c0_14 = arith.constant 0 : index
      %c0_15 = arith.constant 0 : index
      %16 = vector.load %arg6[%c0_14, %c0_15] : memref<8x32xf32, #tpu.memory_space<vmem>>, vector<8x32xf32>
      %c0_16 = arith.constant 0 : index
      %c0_17 = arith.constant 0 : index
      %17 = vector.load %arg2[%c0_16, %c0_17] : memref<8x32xf32, #tpu.memory_space<vmem>>, vector<8x32xf32>
      %18 = arith.addf %16, %17 : vector<8x32xf32>
      %cst_18 = arith.constant dense<0.000000e+00> : vector<8xf32>
      %19 = vector.multi_reduction <add>, %18, %cst_18 [1] : vector<8x32xf32> to vector<8xf32>
      %20 = vector.shape_cast %19 : vector<8xf32> to vector<8x1xf32>
      %cst_19 = arith.constant 3.200000e+01 : f32
      %21 = vector.broadcast %cst_19 : f32 to vector<8x1xf32>
      %22 = arith.divf %20, %21 : vector<8x1xf32>
      %23 = vector.broadcast %22 : vector<8x1xf32> to vector<8x32xf32>
      %24 = arith.subf %18, %23 : vector<8x32xf32>
      %25 = arith.mulf %24, %24 : vector<8x32xf32>
      %cst_20 = arith.constant dense<0.000000e+00> : vector<8xf32>
      %26 = vector.multi_reduction <add>, %25, %cst_20 [1] : vector<8x32xf32> to vector<8xf32>
      %27 = vector.shape_cast %26 : vector<8xf32> to vector<8x1xf32>
      %cst_21 = arith.constant 3.200000e+01 : f32
      %28 = vector.broadcast %cst_21 : f32 to vector<8x1xf32>
      %29 = arith.divf %27, %28 : vector<8x1xf32>
      %cst_22 = arith.constant 9.99999974E-6 : f32
      %30 = vector.broadcast %cst_22 : f32 to vector<8x1xf32>
      %31 = arith.addf %29, %30 : vector<8x1xf32>
      %32 = math.rsqrt %31 : vector<8x1xf32>
      %33 = vector.broadcast %32 : vector<8x1xf32> to vector<8x32xf32>
      %34 = arith.mulf %24, %33 : vector<8x32xf32>
      %c0_23 = arith.constant 0 : index
      %c0_24 = arith.constant 0 : index
      %35 = vector.load %arg5[%c0_23, %c0_24] : memref<8x32xf32, #tpu.memory_space<vmem>>, vector<8x32xf32>
      tpu.vector_store %arg5[%c0_23, %c0_24], %34 {strides = array<i32>} : memref<8x32xf32, #tpu.memory_space<vmem>>, vector<8x32xf32>,
    } else {
    }
    return
  }
  func.func @transform_0(%arg0: i32, %arg1: i32) -> (i32, i32) {
    %c0_i32 = arith.constant 0 : i32
    %c0_i32_0 = arith.constant 0 : i32
    return %arg0, %c0_i32 : i32, i32
  }
  func.func @transform_1(%arg0: i32, %arg1: i32) -> (i32, i32) {
    %c0_i32 = arith.constant 0 : i32
    %c0_i32_0 = arith.constant 0 : i32
    return %c0_i32, %arg1 : i32, i32
  }
  func.func @transform_2(%arg0: i32, %arg1: i32) -> (i32, i32) {
    %c0_i32 = arith.constant 0 : i32
    %c0_i32_0 = arith.constant 0 : i32
    return %arg1, %c0_i32 : i32, i32
  }
  func.func @transform_3(%arg0: i32, %arg1: i32) -> (i32, i32) {
    %c0_i32 = arith.constant 0 : i32
    %c0_i32_0 = arith.constant 0 : i32
    return %arg0, %c0_i32 : i32, i32
  }
}

</mosaic_0001>

<llo_original>
// kernel: tpu_custom_call.1
$region0: #{tpu_custom_call.1}
  #allocation0 [shape = 'u32[]', space=smem, size = 0x4, offset = 0x4, fixed_abs, tag = 'smem constant byte address 0x4 - core index']
  #allocation1 [shape = 'u32[144,128]{1,0:T(1,128)}', space=vmem, size = 0x12000, scoped, tag = 'internal scratch']
  #allocation2 [shape = 'f32[8,32]{1,0:T(8,128)}', space=vmem, size = 0x1000, scoped, tag = 'scratch operand']
  %s0 = inlined_call_operand.hbm [shape: f32[16,32], index: 0, kind: input, shape index: {}]
  %s1 = inlined_call_operand.hbm [shape: f32[32,64], index: 1, kind: input, shape index: {}]
  %s2 = inlined_call_operand.hbm [shape: f32[64,32], index: 2, kind: input, shape index: {}]
  %s3 = inlined_call_operand.hbm [shape: f32[16,32], index: 3, kind: output, shape index: {}]
  %s4 = sld [smem:[#allocation0]]
  $region65: #{tpu_custom_call.1} parent=0
    _
  %s6 = ssub.s32 1, %s4
  %s7 = scalar_select 0, %s6, %s4
  $region1: #{tpu_custom_call.1} parent=0
    #allocation3 [shape = 'u8[8192]{0}', space=vmem, size = 0x2000, scoped, tag = 'input window, operand 0']
    #allocation4 [shape = 's32[2]{0}', space=sflag, size = 0x8, scoped, tag = 'scoped memory for tpu_custom_call.1']
    #allocation5 [shape = 's32[2]{0}', space=sflag, size = 0x8, scoped, tag = 'scoped memory for tpu_custom_call.1']
    #allocation6 [shape = 'u8[16384]{0}', space=vmem, size = 0x4000, scoped, tag = 'input window, operand 1, single buffered']
    #allocation7 [shape = 's32[1]{0}', space=sflag, size = 0x4, scoped, tag = 'scoped memory for tpu_custom_call.1']
    #allocation8 [shape = 'u8[32768]{0}', space=vmem, size = 0x8000, scoped, tag = 'input window, operand 2, single buffered']
    #allocation9 [shape = 'u8[8192]{0}', space=vmem, size = 0x2000, scoped, tag = 'output window, operand 0']
    %8 = vsyncpa [#allocation4], 0
    %s9 = scalar_lea.sflag [#allocation4], 1
    %10 = vsyncpa %s9, 0
    %11 = vsyncpa [#allocation7], 0
    %12 = vsyncpa [#allocation5], 0
    %s13 = scalar_lea.sflag [#allocation5], 1
    %14 = vsyncpa %s13, 0
    loop: start=0, step=1, limit=4
    $region2: #{tpu_custom_call.1} parent=1 // loop_pre_header
      _
    $region3: #{tpu_custom_call.1} parent=1 // loop_header
      %s16 = sphi 0, %s20
      %p17 = scmp.ge.s32.totalorder %s16, 4
      %s23 = sphi 0, %s35
      %s24 = sphi 0, %s31
      %s25 = sphi 0, %s23
      %s26 = sphi 0, %s24
      %s27 = sphi 0, %s25
      %s28 = sphi 0, %s26
      %s38 = sphi 0, %s40
      %s41 = sphi 0, %s38
      %s42 = sphi 0, %s41
      %s58 = sphi 0, %s42
      %s64 = sphi 0, %s66
      %s67 = sphi 0, %s64
      %s68 = sphi 0, %s67
      %s84 = sphi 0, %s68
      %s90 = sphi 0, %s92
      %s93 = sphi 0, %s90
      %s94 = sphi 0, %s93
      %s110 = sphi 0, %s94
      %s116 = sphi 0, %s118
      %s119 = sphi 0, %s116
      %s120 = sphi 0, %s119
      %s136 = sphi 0, %s120
    $region4: #{tpu_custom_call.1} parent=1 // loop_header_branch
      %19 = sbr.rel (%p17) target = $region8
    $region5: #{tpu_custom_call.1} parent=1 // loop_body
      %s21 = ssub.s32 %s16, 1
      %s22 = ssub.s32 %s16, 2
      %s29 = sadd.s32 1, %s24
      %p30 = scmp.ge.s32.totalorder %s29, 1
      %s31 = scalar_select %p30, 0, %s29
      %s32 = sadd.s32 1, %s23
      %s33 = scalar_select %p30, %s32, %s23
      %p34 = scmp.ge.s32.totalorder %s33, 2
      %s35 = scalar_select %p34, 0, %s33
      %s36 = ssub.s32 %s23, %s35
      %p37 = scmp.eq.s32.totalorder %s36, 0
      %s39 = sadd.s32 %s38, 1
      %s40 = scalar_select %p37, %s38, %s39
      %p43 = pneg %p37
      %p44 = scmp.eq.s32.totalorder %s16, 1
      %p45 = por %p43, %p44
      %p46 = scmp.ne.s32.totalorder %s38, %s41
      %p47 = scmp.eq.s32.totalorder %s16, 0
      %p48 = por %p46, %p47
      %p49 = scmp.ne.s32.totalorder %s38, %s41
      %p50 = scmp.eq.s32.totalorder %s21, 1
      %p51 = por %p49, %p50
      %p52 = scmp.ne.s32.totalorder %s41, %s42
      %p53 = scmp.eq.s32.totalorder %s21, 0
      %p54 = por %p52, %p53
      %p55 = scmp.ne.s32.totalorder %s41, %s42
      %p56 = scmp.eq.s32.totalorder %s22, 1
      %p57 = por %p55, %p56
      %p59 = scmp.ne.s32.totalorder %s42, %s58
      %p60 = scmp.eq.s32.totalorder %s22, 0
      %p61 = por %p59, %p60
      %s62 = ssub.s32 %s24, %s31
      %p63 = scmp.eq.s32.totalorder %s62, 0
      %s65 = sadd.s32 %s64, 1
      %s66 = scalar_select %p63, %s64, %s65
      %p69 = pneg %p63
      %p70 = scmp.eq.s32.totalorder %s16, 1
      %p71 = por %p69, %p70
      %p72 = scmp.ne.s32.totalorder %s64, %s67
      %p73 = scmp.eq.s32.totalorder %s16, 0
      %p74 = por %p72, %p73
      %p75 = scmp.ne.s32.totalorder %s64, %s67
      %p76 = scmp.eq.s32.totalorder %s21, 1
      %p77 = por %p75, %p76
      %p78 = scmp.ne.s32.totalorder %s67, %s68
      %p79 = scmp.eq.s32.totalorder %s21, 0
      %p80 = por %p78, %p79
      %p81 = scmp.ne.s32.totalorder %s67, %s68
      %p82 = scmp.eq.s32.totalorder %s22, 1
      %p83 = por %p81, %p82
      %p85 = scmp.ne.s32.totalorder %s68, %s84
      %p86 = scmp.eq.s32.totalorder %s22, 0
      %p87 = por %p85, %p86
      %s88 = ssub.s32 %s24, %s31
      %p89 = scmp.eq.s32.totalorder %s88, 0
      %s91 = sadd.s32 %s90, 1
      %s92 = scalar_select %p89, %s90, %s91
      %p95 = pneg %p89
      %p96 = scmp.eq.s32.totalorder %s16, 1
      %p97 = por %p95, %p96
      %p98 = scmp.ne.s32.totalorder %s90, %s93
      %p99 = scmp.eq.s32.totalorder %s16, 0
      %p100 = por %p98, %p99
      %p101 = scmp.ne.s32.totalorder %s90, %s93
      %p102 = scmp.eq.s32.totalorder %s21, 1
      %p103 = por %p101, %p102
      %p104 = scmp.ne.s32.totalorder %s93, %s94
      %p105 = scmp.eq.s32.totalorder %s21, 0
      %p106 = por %p104, %p105
      %p107 = scmp.ne.s32.totalorder %s93, %s94
      %p108 = scmp.eq.s32.totalorder %s22, 1
      %p109 = por %p107, %p108
      %p111 = scmp.ne.s32.totalorder %s94, %s110
      %p112 = scmp.eq.s32.totalorder %s22, 0
      %p113 = por %p111, %p112
      %s114 = ssub.s32 %s23, %s35
      %p115 = scmp.eq.s32.totalorder %s114, 0
      %s117 = sadd.s32 %s116, 1
      %s118 = scalar_select %p115, %s116, %s117
      %p121 = pneg %p115
      %p122 = scmp.eq.s32.totalorder %s16, 1
      %p123 = por %p121, %p122
      %p124 = scmp.ne.s32.totalorder %s116, %s119
      %p125 = scmp.eq.s32.totalorder %s16, 0
      %p126 = por %p124, %p125
      %p127 = scmp.ne.s32.totalorder %s116, %s119
      %p128 = scmp.eq.s32.totalorder %s21, 1
      %p129 = por %p127, %p128
      %p130 = scmp.ne.s32.totalorder %s119, %s120
      %p131 = scmp.eq.s32.totalorder %s21, 0
      %p132 = por %p130, %p131
      %p133 = scmp.ne.s32.totalorder %s119, %s120
      %p134 = scmp.eq.s32.totalorder %s22, 1
      %p135 = por %p133, %p134
      %p137 = scmp.ne.s32.totalorder %s120, %s136
      %p138 = scmp.eq.s32.totalorder %s22, 0
      %p139 = por %p137, %p138
      %p140 = scmp.le.s32.totalorder 1, %s16
      %p141 = scmp.lt.s32.totalorder %s16, 3
      %p142 = pnand %p140, %p141
      %p143 = pneg %p142
      // Predicated region
      $region9: #{tpu_custom_call.1} parent=5 // pred_check
        _
      $region10: #{tpu_custom_call.1} parent=5 // pred_check_branch
        %145 = sbr.rel (%p142) target = $region12
      $region11: #{tpu_custom_call.1} parent=5 // pred_region
        %s146 = ssub.s32 %s16, 1
        // Predicated region
        $region13: #{tpu_custom_call.1} parent=11 // pred_check
          %p147 = pneg %p80
        $region14: #{tpu_custom_call.1} parent=11 // pred_check_branch
          %149 = sbr.rel (%p147) target = $region16
        $region15: #{tpu_custom_call.1} parent=11 // pred_region
          %s151 = ssub.s32 512, 512
          %152 = vsyncadd [#allocation7], %s151
          %s153 = smul.addr %s26, 128
          %s154 = scalar_lea.hbm %s1, %s153
          %s155 = sshll.u32 [#allocation6], 4
          %s156 = int_to_ptr.vmem [resolvable:$true] %s155
          %161 = dma.hbm_to_vmem [thread:$0]  %s154, 512, %s156, [#allocation7], 128, 128, 8
        $region16: #{tpu_custom_call.1} parent=11 // pred_fallthru
          _
        // Predicated region
        $region17: #{tpu_custom_call.1} parent=11 // pred_check
          %p162 = pneg %p106
        $region18: #{tpu_custom_call.1} parent=11 // pred_check_branch
          %164 = sbr.rel (%p162) target = $region20
        $region19: #{tpu_custom_call.1} parent=11 // pred_region
          %s165 = smul.u32 8, %s26
          %s167 = ssub.s32 1024, 1024
          %168 = vsyncadd [#allocation7], %s167
          %s169 = smul.addr %s165, 128
          %s170 = scalar_lea.hbm %s2, %s169
          %s171 = sshll.u32 [#allocation8], 4
          %s172 = int_to_ptr.vmem [resolvable:$true] %s171
          %177 = dma.hbm_to_vmem [thread:$0]  %s170, 1024, %s172, [#allocation7], 128, 128, 8
        $region20: #{tpu_custom_call.1} parent=11 // pred_fallthru
          _
      $region12: #{tpu_custom_call.1} parent=5 // pred_fallthru
        _
      %p178 = scmp.lt.s32.totalorder %s16, 2
      // Predicated region
      $region21: #{tpu_custom_call.1} parent=5 // pred_check
        %p179 = pneg %p178
      $region22: #{tpu_custom_call.1} parent=5 // pred_check_branch
        %181 = sbr.rel (%p179) target = $region24
      $region23: #{tpu_custom_call.1} parent=5 // pred_region
        // Predicated region
        $region25: #{tpu_custom_call.1} parent=23 // pred_check
          %p182 = pneg %p48
        $region26: #{tpu_custom_call.1} parent=23 // pred_check_branch
          %184 = sbr.rel (%p182) target = $region28
        $region27: #{tpu_custom_call.1} parent=23 // pred_region
          %s185 = sand.u32 %s38, 1
          %s186 = scalar_lea.sflag [#allocation4], %s185
          %s187 = sand.u32 %s38, 1
          %s188 = smul.addr %s187, 8
          %s189 = scalar_lea.vmem [#allocation3], %s188
          %s191 = ssub.s32 128, 128
          %192 = vsyncadd %s186, %s191
          %s193 = smul.addr %s23, 128
          %s194 = scalar_lea.hbm %s0, %s193
          %s196 = sshll.u32 %s189, 4
          %s197 = int_to_ptr.vmem [resolvable:$true] %s196
          %199 = dma.hbm_to_vmem [thread:$0]  %s194, 128, %s197, %s186
        $region28: #{tpu_custom_call.1} parent=23 // pred_fallthru
          _
      $region24: #{tpu_custom_call.1} parent=5 // pred_fallthru
        _
      %p200 = scmp.le.s32.totalorder 1, %s16
      %p201 = scmp.lt.s32.totalorder %s16, 3
      %p202 = pnand %p200, %p201
      %p203 = pneg %p202
      // Predicated region
      $region29: #{tpu_custom_call.1} parent=5 // pred_check
        _
      $region30: #{tpu_custom_call.1} parent=5 // pred_check_branch
        %205 = sbr.rel (%p202) target = $region32
      $region31: #{tpu_custom_call.1} parent=5 // pred_region
        %s206 = ssub.s32 %s16, 1
        %s207 = sand.u32 %s41, 1
        %s208 = scalar_lea.sflag [#allocation4], %s207
        %s209 = sand.u32 %s41, 1
        %s210 = smul.addr %s209, 8
        %s211 = scalar_lea.vmem [#allocation3], %s210
        // Predicated region
        $region33: #{tpu_custom_call.1} parent=31 // pred_check
          %p212 = pneg %p54
        $region34: #{tpu_custom_call.1} parent=31 // pred_check_branch
          %214 = sbr.rel (%p212) target = $region36
        $region35: #{tpu_custom_call.1} parent=31 // pred_region
          %215 = dma.done %s208, 128
        $region36: #{tpu_custom_call.1} parent=31 // pred_fallthru
          _
        // Predicated region
        $region37: #{tpu_custom_call.1} parent=31 // pred_check
          %p216 = pneg %p80
        $region38: #{tpu_custom_call.1} parent=31 // pred_check_branch
          %218 = sbr.rel (%p216) target = $region40
        $region39: #{tpu_custom_call.1} parent=31 // pred_region
          %219 = dma.done [#allocation7], 512
        $region40: #{tpu_custom_call.1} parent=31 // pred_fallthru
          _
        // Predicated region
        $region41: #{tpu_custom_call.1} parent=31 // pred_check
          %p220 = pneg %p106
        $region42: #{tpu_custom_call.1} parent=31 // pred_check_branch
          %222 = sbr.rel (%p220) target = $region44
        $region43: #{tpu_custom_call.1} parent=31 // pred_region
          %223 = dma.done [#allocation7], 1024
        $region44: #{tpu_custom_call.1} parent=31 // pred_fallthru
          _
        %s224 = sand.u32 %s41, 1
        %s225 = scalar_lea.sflag [#allocation4], %s224
        %s226 = sand.u32 %s41, 1
        %s227 = smul.addr %s226, 8
        %s228 = scalar_lea.vmem [#allocation3], %s227
        %p229 = pneg %p54
        %p230 = pneg %p51
        %p231 = pneg %p80
        %p232 = pneg %p77
        %p233 = pneg %p106
        %p234 = pneg %p103
        %p235 = pneg %p132
        %p236 = pneg %p129
        %s237 = sand.u32 %s119, 1
        %s238 = scalar_lea.sflag [#allocation5], %s237
        %s239 = sand.u32 %s119, 1
        %s240 = smul.addr %s239, 8
        %s241 = scalar_lea.vmem [#allocation9], %s240
        %s242 = smul.u32 8, %s26
        %p243 = scmp.eq.s32.totalorder %s26, 0
        // Predicated region
        $region45: #{tpu_custom_call.1} parent=31 // pred_check
          %p244 = pneg %p243
        $region46: #{tpu_custom_call.1} parent=31 // pred_check_branch
          %246 = sbr.rel (%p244) target = $region48
        $region47: #{tpu_custom_call.1} parent=31 // pred_region
          %vm247 = vcmask 261120
          %248 = vst.msk [vmem:[#allocation2] sm:$0xff] %vm247, 0.0
        $region48: #{tpu_custom_call.1} parent=31 // pred_fallthru
          _
        %v249 = vld [vmem:[%s211] sm:$0xff]
        %v250 = vld [vmem:[#allocation6] sm:$0xff]
        %v251 = vld [vmem:[#allocation6 + $0x8] sm:$0xff]
        %v252 = vld [vmem:[#allocation6 + $0x10] sm:$0xff]
        %v253 = vld [vmem:[#allocation6 + $0x18] sm:$0xff]
        %vm254 = vcmask 261120
        %v256 = vsel %vm254, %v249, 0
        %258 = vmatprep.subr.mxu0 0.0
        %259 = vmatpush1.msra.mxu0 %v250
        %260 = vmatprep.subr.mxu0 0.0
        %261 = vmatpush1.msra.mxu0 %v251
        %262 = vmatprep.subr.mxu0 0.0
        %263 = vmatpush1.msra.mxu0 %v252
        %264 = vmatprep.subr.mxu0 0.0
        %265 = vmatpush1.msra.mxu0 %v253
        %266 = vmatprep.subr.mxu0 0.0
        %267 = vmatpush1.msra.mxu0 0.0
        %268 = vmatprep.subr.mxu0 0.0
        %269 = vmatpush1.msra.mxu0 0.0
        %270 = vmatprep.subr.mxu0 0.0
        %271 = vmatpush1.msra.mxu0 0.0
        %272 = vmatprep.subr.mxu0 0.0
        %273 = vmatpush1.msra.mxu0 0.0
        %274 = vmatprep.subr.mxu0 0.0
        %275 = vmatpush1.msra.mxu0 0.0
        %276 = vmatprep.subr.mxu0 0.0
        %277 = vmatpush1.msra.mxu0 0.0
        %278 = vmatprep.subr.mxu0 0.0
        %279 = vmatpush1.msra.mxu0 0.0
        %280 = vmatprep.subr.mxu0 0.0
        %281 = vmatpush1.msra.mxu0 0.0
        %282 = vmatprep.subr.mxu0 0.0
        %283 = vmatpush1.msra.mxu0 0.0
        %284 = vmatprep.subr.mxu0 0.0
        %285 = vmatpush1.msra.mxu0 0.0
        %286 = vmatprep.subr.mxu0 0.0
        %287 = vmatpush1.msra.mxu0 0.0
        %288 = vmatprep.subr.mxu0 0.0
        %289 = vmatpush1.msra.mxu0 0.0
        %290 = vmatprep.subr.mxu0 0.0
        %291 = vmatpush1.msra.mxu0 0.0
        %292 = vmatprep.subr.mxu0 0.0
        %293 = vmatpush1.msra.mxu0 0.0
        %294 = vmatprep.subr.mxu0 0.0
        %295 = vmatpush1.msra.mxu0 0.0
        %296 = vmatprep.subr.mxu0 0.0
        %297 = vmatpush1.msra.mxu0 0.0
        %298 = vmatprep.subr.mxu0 0.0
        %299 = vmatpush1.msra.mxu0 0.0
        %300 = vmatprep.subr.mxu0 0.0
        %301 = vmatpush1.msra.mxu0 0.0
        %302 = vmatprep.subr.mxu0 0.0
        %303 = vmatpush1.msra.mxu0 0.0
        %304 = vmatprep.subr.mxu0 0.0
        %305 = vmatpush1.msra.mxu0 0.0
        %306 = vmatprep.subr.mxu0 0.0
        %307 = vmatpush1.msra.mxu0 0.0
        %308 = vmatprep.subr.mxu0 0.0
        %309 = vmatpush1.msra.mxu0 0.0
        %310 = vmatprep.subr.mxu0 0.0
        %311 = vmatpush1.msra.mxu0 0.0
        %312 = vmatprep.subr.mxu0 0.0
        %313 = vmatpush1.msra.mxu0 0.0
        %314 = vmatprep.subr.mxu0 0.0
        %315 = vmatpush1.msra.mxu0 0.0
        %316 = vmatprep.subr.mxu0 0.0
        %317 = vmatpush1.msra.mxu0 0.0
        %318 = vmatprep.subr.mxu0 0.0
        %319 = vmatpush1.msra.mxu0 0.0
        %320 = vmatprep.subr.mxu0 0.0
        %321 = vmatpush1.msra.mxu0 0.0
        %322 = vmatprep.mubr.f32.mxu0 0.0
        %323 = vmatmul.mubr.f32.gmra.mrb[0].mxu0 %v256
        %v324 = vpop.f32.mrb[0].mxu0
        %v325 = vadd.f32 0.0, %v324
        %v326 = vpop.f32.mrb[0].mxu0
        %327 = vdwg.mxu0
        %v328 = vmax.f32 %v325, 0.0
        %v329 = vld [vmem:[#allocation2] sm:$0xff]
        %v330 = vld [vmem:[#allocation8] sm:$0xff]
        %v331 = vld [vmem:[#allocation8 + $0x8] sm:$0xff]
        %v332 = vld [vmem:[#allocation8 + $0x10] sm:$0xff]
        %v333 = vld [vmem:[#allocation8 + $0x18] sm:$0xff]
        %v334 = vld [vmem:[#allocation8 + $0x20] sm:$0xff]
        %v335 = vld [vmem:[#allocation8 + $0x28] sm:$0xff]
        %v336 = vld [vmem:[#allocation8 + $0x30] sm:$0xff]
        %v337 = vld [vmem:[#allocation8 + $0x38] sm:$0xff]
        %vm338 = vcmask 523264
        %v340 = vsel %vm338, %v328, 0
        %342 = vmatprep.subr.mxu0 0.0
        %343 = vmatpush1.msra.mxu0 %v330
        %344 = vmatprep.subr.mxu0 0.0
        %345 = vmatpush1.msra.mxu0 %v331
        %346 = vmatprep.subr.mxu0 0.0
        %347 = vmatpush1.msra.mxu0 %v332
        %348 = vmatprep.subr.mxu0 0.0
        %349 = vmatpush1.msra.mxu0 %v333
        %350 = vmatprep.subr.mxu0 0.0
        %351 = vmatpush1.msra.mxu0 %v334
        %352 = vmatprep.subr.mxu0 0.0
        %353 = vmatpush1.msra.mxu0 %v335
        %354 = vmatprep.subr.mxu0 0.0
        %355 = vmatpush1.msra.mxu0 %v336
        %356 = vmatprep.subr.mxu0 0.0
        %357 = vmatpush1.msra.mxu0 %v337
        %358 = vmatprep.subr.mxu0 0.0
        %359 = vmatpush1.msra.mxu0 0.0
        %360 = vmatprep.subr.mxu0 0.0
        %361 = vmatpush1.msra.mxu0 0.0
        %362 = vmatprep.subr.mxu0 0.0
        %363 = vmatpush1.msra.mxu0 0.0
        %364 = vmatprep.subr.mxu0 0.0
        %365 = vmatpush1.msra.mxu0 0.0
        %366 = vmatprep.subr.mxu0 0.0
        %367 = vmatpush1.msra.mxu0 0.0
        %368 = vmatprep.subr.mxu0 0.0
        %369 = vmatpush1.msra.mxu0 0.0
        %370 = vmatprep.subr.mxu0 0.0
        %371 = vmatpush1.msra.mxu0 0.0
        %372 = vmatprep.subr.mxu0 0.0
        %373 = vmatpush1.msra.mxu0 0.0
        %374 = vmatprep.subr.mxu0 0.0
        %375 = vmatpush1.msra.mxu0 0.0
        %376 = vmatprep.subr.mxu0 0.0
        %377 = vmatpush1.msra.mxu0 0.0
        %378 = vmatprep.subr.mxu0 0.0
        %379 = vmatpush1.msra.mxu0 0.0
        %380 = vmatprep.subr.mxu0 0.0
        %381 = vmatpush1.msra.mxu0 0.0
        %382 = vmatprep.subr.mxu0 0.0
        %383 = vmatpush1.msra.mxu0 0.0
        %384 = vmatprep.subr.mxu0 0.0
        %385 = vmatpush1.msra.mxu0 0.0
        %386 = vmatprep.subr.mxu0 0.0
        %387 = vmatpush1.msra.mxu0 0.0
        %388 = vmatprep.subr.mxu0 0.0
        %389 = vmatpush1.msra.mxu0 0.0
        %390 = vmatprep.subr.mxu0 0.0
        %391 = vmatpush1.msra.mxu0 0.0
        %392 = vmatprep.subr.mxu0 0.0
        %393 = vmatpush1.msra.mxu0 0.0
        %394 = vmatprep.subr.mxu0 0.0
        %395 = vmatpush1.msra.mxu0 0.0
        %396 = vmatprep.subr.mxu0 0.0
        %397 = vmatpush1.msra.mxu0 0.0
        %398 = vmatprep.subr.mxu0 0.0
        %399 = vmatpush1.msra.mxu0 0.0
        %400 = vmatprep.subr.mxu0 0.0
        %401 = vmatpush1.msra.mxu0 0.0
        %402 = vmatprep.subr.mxu0 0.0
        %403 = vmatpush1.msra.mxu0 0.0
        %404 = vmatprep.subr.mxu0 0.0
        %405 = vmatpush1.msra.mxu0 0.0
        %406 = vmatprep.mubr.f32.mxu0 0.0
        %407 = vmatmul.mubr.f32.gmra.mrb[0].mxu0 %v340
        %v408 = vpop.f32.mrb[0].mxu0
        %v409 = vadd.f32 0.0, %v408
        %v410 = vpop.f32.mrb[0].mxu0
        %411 = vdwg.mxu0
        %v412 = vadd.f32 %v329, %v409
        %413 = vst.msk [vmem:[#allocation2] sm:$0xff] %vm254, %v412
        // Predicated region
        $region49: #{tpu_custom_call.1} parent=31 // pred_check
          %p414 = pneg %p243
        $region50: #{tpu_custom_call.1} parent=31 // pred_check_branch
          %416 = sbr.rel (%p414) target = $region52
        $region51: #{tpu_custom_call.1} parent=31 // pred_region
          %v417 = vld [vmem:[#allocation2] sm:$0xff]
          %v418 = vld [vmem:[%s211] sm:$0xff]
          %v419 = vadd.f32 %v417, %v418
          %v420 = vsel %vm254, %v419, 0.0
          %421 = vadd.xlane.f32.xlu0 %v420
          %v422 = vpop.xlane.xlu0 %421
          %v423 = vrcp.pop 32.0
          %v424 = vmul.f32 %v422, %v423
          %v425 = vsub.f32 %v419, %v424
          %v426 = vmul.f32 %v425, %v425
          %v427 = vsel %vm254, %v426, 0.0
          %428 = vadd.xlane.f32.xlu0 %v427
          %v429 = vpop.xlane.xlu0 %428
          %v430 = vmul.f32 %v429, %v423
          %v431 = vadd.f32 %v430, 1e-05
          %v432 = vrsqrt.pop %v431
          %v433 = vmul.f32 %v425, %v432
          %434 = vst.msk [vmem:[%s241] sm:$0xff] %vm254, %v433
        $region52: #{tpu_custom_call.1} parent=31 // pred_fallthru
          _
        %s435 = sand.u32 %s119, 1
        %s436 = scalar_lea.sflag [#allocation5], %s435
        %s437 = sand.u32 %s119, 1
        %s438 = smul.addr %s437, 8
        %s439 = scalar_lea.vmem [#allocation9], %s438
        // Predicated region
        $region53: #{tpu_custom_call.1} parent=31 // pred_check
          %p440 = pneg %p129
        $region54: #{tpu_custom_call.1} parent=31 // pred_check_branch
          %442 = sbr.rel (%p440) target = $region56
        $region55: #{tpu_custom_call.1} parent=31 // pred_region
          %s444 = ssub.s32 128, 128
          %445 = vsyncadd %s436, %s444
          %s446 = smul.addr %s25, 128
          %s447 = scalar_lea.hbm %s3, %s446
          %s449 = sshll.u32 %s439, 4
          %s450 = int_to_ptr.vmem [resolvable:$true] %s449
          %452 = dma.vmem_to_hbm [thread:$0]  %s450, 128, %s447, %s436
        $region56: #{tpu_custom_call.1} parent=31 // pred_fallthru
          _
      $region32: #{tpu_custom_call.1} parent=5 // pred_fallthru
        _
      %p453 = scmp.le.s32.totalorder 2, %s16
      // Predicated region
      $region57: #{tpu_custom_call.1} parent=5 // pred_check
        %p454 = pneg %p453
      $region58: #{tpu_custom_call.1} parent=5 // pred_check_branch
        %456 = sbr.rel (%p454) target = $region60
      $region59: #{tpu_custom_call.1} parent=5 // pred_region
        %s457 = ssub.s32 %s16, 2
        // Predicated region
        $region61: #{tpu_custom_call.1} parent=59 // pred_check
          %p458 = pneg %p135
        $region62: #{tpu_custom_call.1} parent=59 // pred_check_branch
          %460 = sbr.rel (%p458) target = $region64
        $region63: #{tpu_custom_call.1} parent=59 // pred_region
          %s461 = sand.u32 %s120, 1
          %s462 = scalar_lea.sflag [#allocation5], %s461
          %s463 = sand.u32 %s120, 1
          %s464 = smul.addr %s463, 8
          %s465 = scalar_lea.vmem [#allocation9], %s464
          %466 = dma.done %s462, 128
        $region64: #{tpu_custom_call.1} parent=59 // pred_fallthru
          _
      $region60: #{tpu_custom_call.1} parent=5 // pred_fallthru
        _
    $region6: #{tpu_custom_call.1} parent=1 // loop_footer
      %s20 = sadd.s32 1, %s16
    $region7: #{tpu_custom_call.1} parent=1 // loop_footer_branch
      %15 = sbr.rel target = $region3
    $region8: #{tpu_custom_call.1} parent=1 // loop_exit
      _
    %467 = vsyncpa [#allocation4], 1
    %s468 = scalar_lea.sflag [#allocation4], 1
    %469 = vsyncpa %s468, 1
    %470 = vsyncpa [#allocation7], 1
    %471 = vsyncpa [#allocation5], 1
    %s472 = scalar_lea.sflag [#allocation5], 1
    %473 = vsyncpa %s472, 1

</llo_original>
